<compile_context>
chip_gen: v6e
topology: v6e:2x2x1
jax: 0.10.0
libtpu: 0.0.40
codegen_flags: <defaults>
</compile_context>

<pallas_src>
from functools import partial

import jax
import jax.numpy as jnp
from jax.experimental import pallas as pl
from jax.experimental.pallas import tpu as pltpu


def _round_up(x, m):
    return ((x + m - 1) // m) * m


# -----------------------------------------------------------------------------
# Kernel body: one batch tile, fused  relu(x @ W1 + b1) @ W2 + b2
# -----------------------------------------------------------------------------
def _qnet_kernel(x_ref, w1_ref, b1_ref, w2_ref, b2_ref, out_ref):
    x = x_ref[...]                                              # [tb, Ip] bf16
    # linear1 + ReLU: bf16 MXU matmul, f32 accumulate, f32 bias / ReLU
    h = jnp.dot(x, w1_ref[...], preferred_element_type=jnp.float32) + b1_ref[...]
    h = jnp.maximum(h, 0.0)                                     # [tb, Hp] f32
    # linear2: bf16 MXU matmul, f32 accumulate, f32 bias
    z = jnp.dot(h.astype(jnp.bfloat16), w2_ref[...],
                preferred_element_type=jnp.float32) + b2_ref[...]
    out_ref[...] = z.astype(out_ref.dtype)                      # lane-dense store


# -----------------------------------------------------------------------------
# Parameter packing (torch layout -> kernel layout)
# -----------------------------------------------------------------------------
def pack_params(w1, b1, w2, b2):
    """Torch-layout params (w1:[H,I], b1:[H], w2:[O,H], b2:[O]) ->
    pre-transposed, padded, bf16 weights + f32 biases for the kernel.

    Padding is zero-filled, so padded input/hidden/output lanes compute to
    exactly 0 and never contaminate the real Q-values."""
    H, I = w1.shape
    O = w2.shape[0]
    Ip = _round_up(I, 16)     # K dim: sublane-aligned only; x is padded to match
    Hp = _round_up(H, 128)    # hidden lanes: 128 for MXU / lane density
    Op = _round_up(O, 128)    # output lanes: 128 -> unmasked vst on the store
    w1t = jnp.zeros((Ip, Hp), jnp.bfloat16).at[:I, :H].set(w1.T.astype(jnp.bfloat16))
    b1p = jnp.zeros((1, Hp), jnp.float32).at[0, :H].set(b1.astype(jnp.float32))
    w2t = jnp.zeros((Hp, Op), jnp.bfloat16).at[:H, :O].set(w2.T.astype(jnp.bfloat16))
    b2p = jnp.zeros((1, Op), jnp.float32).at[0, :O].set(b2.astype(jnp.float32))
    return (w1t, b1p, w2t, b2p), O


# -----------------------------------------------------------------------------
# Batch tiling: minimal padding, Bp % tb == 0, tb a multiple of 16 (or == Bp)
# -----------------------------------------------------------------------------
def _choose_batch_tiling(B, *, max_tile=1024, split_threshold=256, sub=16):
    Bp = _round_up(B, sub)
    if Bp < split_threshold:
        return Bp, Bp                      # tiny batch: single grid step
    if Bp <= 2 * max_tile:
        # Balanced 2-way split: both v7x TensorCores get real rows; costs only
        # one extra grid step (+<=15 padded rows) on single-TC v5e/v6e.
        tb = _round_up(-(-Bp // 2), sub)
        return 2 * tb, tb
    # Large batches: biggest multiple-of-16 tile <= max_tile dividing Bp.
    for tb in range(max_tile, sub - 1, -sub):
        if Bp % tb == 0:
            return Bp, tb
    tb = max_tile
    return _round_up(Bp, tb), tb


# -----------------------------------------------------------------------------
# Forward wrapper
# -----------------------------------------------------------------------------
@partial(jax.jit, static_argnames=("output_size",))
def linear_qnet_forward(x, packed, output_size):
    """x: [B, I] f32 -> [B, output_size] f32 (= linear2(relu(linear1(x))))."""
    w1t, b1p, w2t, b2p = packed
    B, I = x.shape
    Ip, Hp = w1t.shape
    Op = w2t.shape[1]

    Bp, tb = _choose_batch_tiling(B)

    # Pad batch rows / K lanes with zeros and cast to bf16 (fused under jit).
    if (Bp, Ip) == (B, I) and x.dtype == jnp.bfloat16:
        xp = x
    else:
        xp = jnp.zeros((Bp, Ip), jnp.bfloat16).at[:B, :I].set(
            x.astype(jnp.bfloat16))

    out = pl.pallas_call(
        _qnet_kernel,
        out_shape=jax.ShapeDtypeStruct((Bp, Op), jnp.float32),
        grid=(Bp // tb,),
        in_specs=[
            pl.BlockSpec((tb, Ip), lambda i: (i, 0)),   # x tile: streamed
            pl.BlockSpec((Ip, Hp), lambda i: (0, 0)),   # W1^T: resident
            pl.BlockSpec((1, Hp), lambda i: (0, 0)),    # b1:   resident
            pl.BlockSpec((Hp, Op), lambda i: (0, 0)),   # W2^T: resident
            pl.BlockSpec((1, Op), lambda i: (0, 0)),    # b2:   resident
        ],
        out_specs=pl.BlockSpec((tb, Op), lambda i: (i, 0)),
        compiler_params=pltpu.CompilerParams(
            dimension_semantics=("parallel",)),          # shard batch across TCs
    )(xp, w1t, b1p, w2t, b2p)
    return out[:B, :output_size]


def init_params(key, input_size, hidden_size, output_size):
    """Deterministic init mimicking nn.Linear's U(-1/sqrt(fan_in), 1/sqrt(fan_in)),
    in PyTorch layout (W: [out_features, in_features])."""
    k1, k2, k3, k4 = jax.random.split(key, 4)
    lim1 = 1.0 / jnp.sqrt(jnp.float32(input_size))
    lim2 = 1.0 / jnp.sqrt(jnp.float32(hidden_size))
    w1 = jax.random.uniform(k1, (hidden_size, input_size), jnp.float32, -lim1, lim1)
    b1 = jax.random.uniform(k2, (hidden_size,), jnp.float32, -lim1, lim1)
    w2 = jax.random.uniform(k3, (output_size, hidden_size), jnp.float32, -lim2, lim2)
    b2 = jax.random.uniform(k4, (output_size,), jnp.float32, -lim2, lim2)
    return w1, b1, w2, b2


# TODO(synk): Linear_QNet.save()/load() (torch checkpoint I/O) have no Pallas
# equivalent and are intentionally not implemented.

if __name__ == "__main__":
    # Shapes consistent with a snake-game Q-network: input=11 (state),
    # hidden=32, output=3 (actions).
    batch, input_size, hidden_size, output_size = 2, 11, 32, 3

    key = jax.random.PRNGKey(0)
    kx, kp, kbig = jax.random.split(key, 3)
    w1, b1, w2, b2 = init_params(kp, input_size, hidden_size, output_size)
    packed, out_dim = pack_params(w1, b1, w2, b2)

    def ref_fwd_bf16(x):
        # Reference matching the kernel's numerics: bf16 operands, f32 accumulate.
        f32 = jnp.float32
        xb = x.astype(jnp.bfloat16).astype(f32)
        w1b = w1.astype(jnp.bfloat16).astype(f32)
        w2b = w2.astype(jnp.bfloat16).astype(f32)
        h = jnp.maximum(xb @ w1b.T + b1, 0.0)
        hb = h.astype(jnp.bfloat16).astype(f32)
        return hb @ w2b.T + b2

    def ref_fwd_f32(x):
        return jnp.maximum(x @ w1.T + b1, 0.0) @ w2.T + b2

    # 1) Tiny action-selection batch (single grid step).
    x = jax.random.normal(kx, (batch, input_size), jnp.float32)
    out = linear_qnet_forward(x, packed, out_dim)
    jax.block_until_ready(out)
    assert out.shape == (batch, output_size)
    assert jnp.allclose(out, ref_fwd_bf16(x), atol=1e-3, rtol=1e-3)
    assert jnp.allclose(out, ref_fwd_f32(x), atol=3e-2, rtol=3e-2)

    # 2) Replay-buffer minibatch: 2 balanced batch tiles (320 padded rows).
    xb = jax.random.normal(kbig, (300, input_size), jnp.float32)
    outb = linear_qnet_forward(xb, packed, out_dim)
    jax.block_until_ready(outb)
    assert outb.shape == (300, output_size)
    assert jnp.allclose(outb, ref_fwd_bf16(xb), atol=1e-3, rtol=1e-3)
    assert jnp.allclose(outb, ref_fwd_f32(xb), atol=3e-2, rtol=3e-2)

    print("KERNEL_OK")
</pallas_src>

<mosaic_0001>
module attributes {stable_mosaic.version = 11 : i64} {
  func.func @_qnet_kernel(%arg0: i32, %arg1: memref<16x16xbf16, #tpu.memory_space<vmem>>, %arg2: memref<16x128xbf16, #tpu.memory_space<vmem>>, %arg3: memref<1x128xf32, #tpu.memory_space<vmem>>, %arg4: memref<128x128xbf16, #tpu.memory_space<vmem>>, %arg5: memref<1x128xf32, #tpu.memory_space<vmem>>, %arg6: memref<16x128xf32, #tpu.memory_space<vmem>>) attributes {dimension_semantics = [#tpu.dimension_semantics<parallel>], iteration_bounds = array<i64: 1>, scalar_prefetch = 0 : i64, scratch_operands = 0 : i64, tpu.core_type = #tpu.core_type<tc>, window_params = [{transform_indices = @transform_0, window_bounds = array<i64: 16, 16>}, {pipeline_mode = #tpu.pipeline_mode<synchronous>, transform_indices = @transform_1, window_bounds = array<i64: 16, 128>}, {pipeline_mode = #tpu.pipeline_mode<synchronous>, transform_indices = @transform_2, window_bounds = array<i64: 1, 128>}, {pipeline_mode = #tpu.pipeline_mode<synchronous>, transform_indices = @transform_3, window_bounds = array<i64: 128, 128>}, {pipeline_mode = #tpu.pipeline_mode<synchronous>, transform_indices = @transform_4, window_bounds = array<i64: 1, 128>}, {transform_indices = @transform_5, window_bounds = array<i64: 16, 128>}]} {
    %c0 = arith.constant 0 : index
    %c0_0 = arith.constant 0 : index
    %0 = vector.load %arg1[%c0, %c0_0] : memref<16x16xbf16, #tpu.memory_space<vmem>>, vector<16x16xbf16>
    %c0_1 = arith.constant 0 : index
    %c0_2 = arith.constant 0 : index
    %1 = vector.load %arg2[%c0_1, %c0_2] : memref<16x128xbf16, #tpu.memory_space<vmem>>, vector<16x128xbf16>
    %cst = arith.constant dense<0.000000e+00> : vector<16x128xf32>
    %2 = tpu.matmul %0, %1, %cst {dimension_numbers = #tpu.dot_dimension_numbers<[1], [0], [0], [1], [0, 0, 1, 1], [], []>} : vector<16x16xbf16>, vector<16x128xbf16>, vector<16x128xf32> -> vector<16x128xf32>
    %c0_3 = arith.constant 0 : index
    %c0_4 = arith.constant 0 : index
    %3 = vector.load %arg3[%c0_3, %c0_4] : memref<1x128xf32, #tpu.memory_space<vmem>>, vector<1x128xf32>
    %4 = vector.broadcast %3 : vector<1x128xf32> to vector<16x128xf32>
    %5 = arith.addf %2, %4 : vector<16x128xf32>
    %cst_5 = arith.constant 0.000000e+00 : f32
    %6 = vector.broadcast %cst_5 : f32 to vector<16x128xf32>
    %7 = arith.maximumf %5, %6 : vector<16x128xf32>
    %8 = arith.truncf %7 : vector<16x128xf32> to vector<16x128xbf16>
    %c0_6 = arith.constant 0 : index
    %c0_7 = arith.constant 0 : index
    %9 = vector.load %arg4[%c0_6, %c0_7] : memref<128x128xbf16, #tpu.memory_space<vmem>>, vector<128x128xbf16>
    %cst_8 = arith.constant dense<0.000000e+00> : vector<16x128xf32>
    %10 = tpu.matmul %8, %9, %cst_8 {dimension_numbers = #tpu.dot_dimension_numbers<[1], [0], [0], [1], [0, 0, 1, 1], [], []>} : vector<16x128xbf16>, vector<128x128xbf16>, vector<16x128xf32> -> vector<16x128xf32>
    %c0_9 = arith.constant 0 : index
    %c0_10 = arith.constant 0 : index
    %11 = vector.load %arg5[%c0_9, %c0_10] : memref<1x128xf32, #tpu.memory_space<vmem>>, vector<1x128xf32>
    %12 = vector.broadcast %11 : vector<1x128xf32> to vector<16x128xf32>
    %13 = arith.addf %10, %12 : vector<16x128xf32>
    %c0_11 = arith.constant 0 : index
    %c0_12 = arith.constant 0 : index
    %14 = vector.load %arg6[%c0_11, %c0_12] : memref<16x128xf32, #tpu.memory_space<vmem>>, vector<16x128xf32>
    tpu.vector_store %arg6[%c0_11, %c0_12], %13 {strides = array<i32>} : memref<16x128xf32, #tpu.memory_space<vmem>>, vector<16x128xf32>,
    return
  }
  func.func @transform_0(%arg0: i32) -> (i32, i32) {
    %c0_i32 = arith.constant 0 : i32
    %c0_i32_0 = arith.constant 0 : i32
    return %arg0, %c0_i32 : i32, i32
  }
  func.func @transform_1(%arg0: i32) -> (i32, i32) {
    %c0_i32 = arith.constant 0 : i32
    %c0_i32_0 = arith.constant 0 : i32
    %c0_i32_1 = arith.constant 0 : i32
    return %c0_i32, %c0_i32_0 : i32, i32
  }
  func.func @transform_2(%arg0: i32) -> (i32, i32) {
    %c0_i32 = arith.constant 0 : i32
    %c0_i32_0 = arith.constant 0 : i32
    %c0_i32_1 = arith.constant 0 : i32
    return %c0_i32, %c0_i32_0 : i32, i32
  }
  func.func @transform_3(%arg0: i32) -> (i32, i32) {
    %c0_i32 = arith.constant 0 : i32
    %c0_i32_0 = arith.constant 0 : i32
    %c0_i32_1 = arith.constant 0 : i32
    return %c0_i32, %c0_i32_0 : i32, i32
  }
  func.func @transform_4(%arg0: i32) -> (i32, i32) {
    %c0_i32 = arith.constant 0 : i32
    %c0_i32_0 = arith.constant 0 : i32
    %c0_i32_1 = arith.constant 0 : i32
    return %c0_i32, %c0_i32_0 : i32, i32
  }
  func.func @transform_5(%arg0: i32) -> (i32, i32) {
    %c0_i32 = arith.constant 0 : i32
    %c0_i32_0 = arith.constant 0 : i32
    return %arg0, %c0_i32 : i32, i32
  }
}

</mosaic_0001>

<llo_original>
// kernel: linear_qnet_forward.1
$region0: #{linear_qnet_forward.1}
  #allocation0 [shape = 'u32[]', space=smem, size = 0x4, offset = 0x4, fixed_abs, tag = 'smem constant byte address 0x4 - core index']
  #allocation1 [shape = 'u32[144,128]{1,0:T(1,128)}', space=vmem, size = 0x12000, scoped, tag = 'internal scratch']
  %s0 = inlined_call_operand.vmem [shape: bf16[16,16], index: 0, kind: input, shape index: {}]
  %s1 = inlined_call_operand.vmem [shape: bf16[16,128], index: 1, kind: input, shape index: {}]
  %s2 = inlined_call_operand.vmem [shape: f32[1,128], index: 2, kind: input, shape index: {}]
  %s3 = inlined_call_operand.hbm [shape: bf16[128,128], index: 3, kind: input, shape index: {}]
  %s4 = inlined_call_operand.vmem [shape: f32[1,128], index: 4, kind: input, shape index: {}]
  %s5 = inlined_call_operand.vmem [shape: f32[16,128], index: 5, kind: output, shape index: {}]
  %s6 = sld [smem:[#allocation0]]
  $region34: #{linear_qnet_forward.1} parent=0
    _
  %s8 = ssub.s32 1, %s6
  %s9 = scalar_select 0, %s8, %s6
  $region1: #{linear_qnet_forward.1} parent=0
    #allocation2 [shape = 'u8[32768]{0}', space=vmem, size = 0x8000, scoped, tag = 'input window, operand 3, single buffered']
    #allocation3 [shape = 's32[1]{0}', space=sflag, size = 0x4, scoped, tag = 'scoped memory for linear_qnet_forward.1']
    %10 = vsyncpa [#allocation3], 0
    // Predicated region
    $region2: #{linear_qnet_forward.1} parent=1 // pred_check
      _
    $region3: #{linear_qnet_forward.1} parent=1 // pred_check_branch
      %12 = sbr.rel (0) target = $region5
    $region4: #{linear_qnet_forward.1} parent=1 // pred_region
      _
    $region5: #{linear_qnet_forward.1} parent=1 // pred_fallthru
      _
    // Predicated region
    $region6: #{linear_qnet_forward.1} parent=1 // pred_check
      _
    $region7: #{linear_qnet_forward.1} parent=1 // pred_check_branch
      %14 = sbr.rel (0) target = $region9
    $region8: #{linear_qnet_forward.1} parent=1 // pred_region
      _
    $region9: #{linear_qnet_forward.1} parent=1 // pred_fallthru
      _
    // Predicated region
    $region10: #{linear_qnet_forward.1} parent=1 // pred_check
      _
    $region11: #{linear_qnet_forward.1} parent=1 // pred_check_branch
      %16 = sbr.rel (0) target = $region13
    $region12: #{linear_qnet_forward.1} parent=1 // pred_region
      _
    $region13: #{linear_qnet_forward.1} parent=1 // pred_fallthru
      _
    // Predicated region
    $region14: #{linear_qnet_forward.1} parent=1 // pred_check
      _
    $region15: #{linear_qnet_forward.1} parent=1 // pred_check_branch
      %18 = sbr.rel (0) target = $region17
    $region16: #{linear_qnet_forward.1} parent=1 // pred_region
      %s20 = ssub.s32 1024, 1024
      %21 = vsyncadd [#allocation3], %s20
      %s22 = sshll.u32 [#allocation2], 4
      %s23 = int_to_ptr.vmem [resolvable:$true] %s22
      %28 = dma.hbm_to_vmem [thread:$0]  %s3, 1024, %s23, [#allocation3], 64, 64, 4
    $region17: #{linear_qnet_forward.1} parent=1 // pred_fallthru
      _
    // Predicated region
    $region18: #{linear_qnet_forward.1} parent=1 // pred_check
      _
    $region19: #{linear_qnet_forward.1} parent=1 // pred_check_branch
      %30 = sbr.rel (0) target = $region21
    $region20: #{linear_qnet_forward.1} parent=1 // pred_region
      _
    $region21: #{linear_qnet_forward.1} parent=1 // pred_fallthru
      _
    // Predicated region
    $region22: #{linear_qnet_forward.1} parent=1 // pred_check
      _
    $region23: #{linear_qnet_forward.1} parent=1 // pred_check_branch
      %32 = sbr.rel (0) target = $region25
    $region24: #{linear_qnet_forward.1} parent=1 // pred_region
      %33 = dma.done [#allocation3], 1024
    $region25: #{linear_qnet_forward.1} parent=1 // pred_fallthru
      _
    %v35 = vld [vmem:[%s0] sm:$0xf]
    %v36 = vld [vmem:[%s0 + $0x4] sm:$0xf]
    %v37 = vld [vmem:[%s1] sm:$0xf]
    %v38 = vld [vmem:[%s1 + $0x4] sm:$0xf]
    %v39 = vld [vmem:[%s2] sm:$0x1]
    %v41 = vlaneseq
    %v42 = vshrl.u32 %v41, 7
    %v43 = vsub.s32 0, %v42
    %v44 = vrot.slane %v39, %v43
    %v48 = vunpack.c.l.b16 %v35
    %v49 = vunpack.c.l.b16 %v36
    %v50 = vpack.c.b16 %v49, %v48
    %v53 = vunpack.c.l.b16 %v37
    %v54 = vunpack.c.l.b16 %v38
    %v55 = vpack.c.b16 %v54, %v53
    %vm57 = vcmask 130048
    %v59 = vsel %vm57, %v50, 0
    %61 = vmatprep.subr.bf16.mxu0 0
    %62 = vmatpush1.bf16.msra.mxu0 0
    %63 = vmatprep.subr.bf16.mxu0 0
    %64 = vmatpush1.bf16.msra.mxu0 0
    %65 = vmatprep.subr.bf16.mxu0 0
    %66 = vmatpush1.bf16.msra.mxu0 0
    %67 = vmatprep.subr.bf16.mxu0 0
    %68 = vmatpush1.bf16.msra.mxu0 0
    %69 = vmatprep.subr.bf16.mxu0 0
    %70 = vmatpush1.bf16.msra.mxu0 0
    %71 = vmatprep.subr.bf16.mxu0 0
    %72 = vmatpush1.bf16.msra.mxu0 0
    %73 = vmatprep.subr.bf16.mxu0 0
    %74 = vmatpush1.bf16.msra.mxu0 0
    %75 = vmatprep.subr.bf16.mxu0 0
    %76 = vmatpush1.bf16.msra.mxu0 %v55
    %77 = vmatprep.subr.bf16.mxu0 0
    %78 = vmatpush2.bf16.msra.mxu0 0
    %79 = vmatprep.subr.bf16.mxu0 0
    %80 = vmatpush2.bf16.msra.mxu0 0
    %81 = vmatprep.subr.bf16.mxu0 0
    %82 = vmatpush2.bf16.msra.mxu0 0
    %83 = vmatprep.subr.bf16.mxu0 0
    %84 = vmatpush2.bf16.msra.mxu0 0
    %85 = vmatprep.subr.bf16.mxu0 0
    %86 = vmatpush2.bf16.msra.mxu0 0
    %87 = vmatprep.subr.bf16.mxu0 0
    %88 = vmatpush2.bf16.msra.mxu0 0
    %89 = vmatprep.subr.bf16.mxu0 0
    %90 = vmatpush2.bf16.msra.mxu0 0
    %91 = vmatprep.subr.bf16.mxu0 0
    %92 = vmatpush2.bf16.msra.mxu0 0
    %93 = vmatprep.mubr.bf16.mxu0 0
    %94 = vmatmul.mubr.bf16.gmra.mxu0 %v59
    %v95 = vpop.f32.mrf.mxu0
    %v96 = vadd.f32 %v44, %v95
    %v97 = vpop.f32.mrf.mxu0
    %v98 = vpop.f32.mrf.mxu0
    %v99 = vadd.f32 %v44, %v98
    %v100 = vpop.f32.mrf.mxu0
    %101 = vdwg.mxu0
    %v102 = vmax.f32 %v96, 0.0
    %v103 = vmax.f32 %v99, 0.0
    %v104 = vpack.c.bf16 %v103, %v102
    %v105 = vld [vmem:[#allocation2] sm:$0xf]
    %v106 = vld [vmem:[#allocation2 + $0x4] sm:$0xf]
    %v107 = vld [vmem:[#allocation2 + $0x8] sm:$0xf]
    %v108 = vld [vmem:[#allocation2 + $0xc] sm:$0xf]
    %v109 = vld [vmem:[#allocation2 + $0x10] sm:$0xf]
    %v110 = vld [vmem:[#allocation2 + $0x14] sm:$0xf]
    %v111 = vld [vmem:[#allocation2 + $0x18] sm:$0xf]
    %v112 = vld [vmem:[#allocation2 + $0x1c] sm:$0xf]
    %v113 = vld [vmem:[#allocation2 + $0x20] sm:$0xf]
    %v114 = vld [vmem:[#allocation2 + $0x24] sm:$0xf]
    %v115 = vld [vmem:[#allocation2 + $0x28] sm:$0xf]
    %v116 = vld [vmem:[#allocation2 + $0x2c] sm:$0xf]
    %v117 = vld [vmem:[#allocation2 + $0x30] sm:$0xf]
    %v118 = vld [vmem:[#allocation2 + $0x34] sm:$0xf]
    %v119 = vld [vmem:[#allocation2 + $0x38] sm:$0xf]
    %v120 = vld [vmem:[#allocation2 + $0x3c] sm:$0xf]
    %v121 = vld [vmem:[%s4] sm:$0x1]
    %v123 = vlaneseq
    %v124 = vshrl.u32 %v123, 7
    %v125 = vsub.s32 0, %v124
    %v126 = vrot.slane %v121, %v125
    %v144 = vunpack.c.l.b16 %v105
    %v145 = vunpack.c.l.b16 %v106
    %v146 = vunpack.c.l.b16 %v107
    %v147 = vunpack.c.l.b16 %v108
    %v148 = vunpack.c.l.b16 %v109
    %v149 = vunpack.c.l.b16 %v110
    %v150 = vunpack.c.l.b16 %v111
    %v151 = vunpack.c.l.b16 %v112
    %v152 = vunpack.c.l.b16 %v113
    %v153 = vunpack.c.l.b16 %v114
    %v154 = vunpack.c.l.b16 %v115
    %v155 = vunpack.c.l.b16 %v116
    %v156 = vunpack.c.l.b16 %v117
    %v157 = vunpack.c.l.b16 %v118
    %v158 = vunpack.c.l.b16 %v119
    %v159 = vunpack.c.l.b16 %v120
    %v160 = vpack.c.b16 %v145, %v144
    %v161 = vpack.c.b16 %v147, %v146
    %v162 = vpack.c.b16 %v149, %v148
    %v163 = vpack.c.b16 %v151, %v150
    %v164 = vpack.c.b16 %v153, %v152
    %v165 = vpack.c.b16 %v155, %v154
    %v166 = vpack.c.b16 %v157, %v156
    %v167 = vpack.c.b16 %v159, %v158
    %176 = vmatprep.subr.bf16.mxu0 0
    %177 = vmatpush1.bf16.msra.mxu0 %v167
    %178 = vmatprep.subr.bf16.mxu0 0
    %179 = vmatpush1.bf16.msra.mxu0 %v166
    %180 = vmatprep.subr.bf16.mxu0 0
    %181 = vmatpush1.bf16.msra.mxu0 %v165
    %182 = vmatprep.subr.bf16.mxu0 0
    %183 = vmatpush1.bf16.msra.mxu0 %v164
    %184 = vmatprep.subr.bf16.mxu0 0
    %185 = vmatpush1.bf16.msra.mxu0 %v163
    %186 = vmatprep.subr.bf16.mxu0 0
    %187 = vmatpush1.bf16.msra.mxu0 %v162
    %188 = vmatprep.subr.bf16.mxu0 0
    %189 = vmatpush1.bf16.msra.mxu0 %v161
    %190 = vmatprep.subr.bf16.mxu0 0
    %191 = vmatpush1.bf16.msra.mxu0 %v160
    %192 = vmatprep.subr.bf16.mxu0 0
    %193 = vmatpush2.bf16.msra.mxu0 0
    %194 = vmatprep.subr.bf16.mxu0 0
    %195 = vmatpush2.bf16.msra.mxu0 0
    %196 = vmatprep.subr.bf16.mxu0 0
    %197 = vmatpush2.bf16.msra.mxu0 0
    %198 = vmatprep.subr.bf16.mxu0 0
    %199 = vmatpush2.bf16.msra.mxu0 0
    %200 = vmatprep.subr.bf16.mxu0 0
    %201 = vmatpush2.bf16.msra.mxu0 0
    %202 = vmatprep.subr.bf16.mxu0 0
    %203 = vmatpush2.bf16.msra.mxu0 0
    %204 = vmatprep.subr.bf16.mxu0 0
    %205 = vmatpush2.bf16.msra.mxu0 0
    %206 = vmatprep.subr.bf16.mxu0 0
    %207 = vmatpush2.bf16.msra.mxu0 0
    %208 = vmatprep.mubr.bf16.mxu0 0
    %209 = vmatmul.mubr.bf16.gmra.mxu0 %v104
    %v210 = vpop.f32.mrf.mxu0
    %v211 = vadd.f32 %v126, %v210
    %v212 = vpop.f32.mrf.mxu0
    %v213 = vpop.f32.mrf.mxu0
    %v214 = vadd.f32 %v126, %v213
    %v215 = vpop.f32.mrf.mxu0
    %216 = vdwg.mxu0
    %217 = vst [vmem:[%s5] sm:$0xff] %v211
    %218 = vst [vmem:[%s5 + $0x8] sm:$0xff] %v214
    // Predicated region
    $region26: #{linear_qnet_forward.1} parent=1 // pred_check
      _
    $region27: #{linear_qnet_forward.1} parent=1 // pred_check_branch
      %220 = sbr.rel (0) target = $region29
    $region28: #{linear_qnet_forward.1} parent=1 // pred_region
      _
    $region29: #{linear_qnet_forward.1} parent=1 // pred_fallthru
      _
    // Predicated region
    $region30: #{linear_qnet_forward.1} parent=1 // pred_check
      _
    $region31: #{linear_qnet_forward.1} parent=1 // pred_check_branch
      %222 = sbr.rel (0) target = $region33
    $region32: #{linear_qnet_forward.1} parent=1 // pred_region
      _
    $region33: #{linear_qnet_forward.1} parent=1 // pred_fallthru
      _
    %223 = vsyncpa [#allocation3], 1

</llo_original>
